<compile_context>
chip_gen: v5e
topology: v5e:2x2
jax: 0.10.0
libtpu: 0.0.40
codegen_flags: <defaults>
</compile_context>

<pallas_src>
import math
from functools import partial

import jax
import jax.numpy as jnp
from jax.experimental import pallas as pl
from jax.experimental.pallas import tpu as pltpu


def _build_pe(d_model: int, max_len: int = 5000) -> jnp.ndarray:
    """Deterministic sinusoidal table, identical to the torch __init__."""
    position = jnp.arange(0, max_len, dtype=jnp.float32)[:, None]           # (max_len, 1)
    div_term = jnp.exp(
        jnp.arange(0, d_model, 2, dtype=jnp.float32) * (-math.log(10000.0) / d_model)
    )                                                                        # (d_model/2,)
    pe = jnp.zeros((max_len, d_model), dtype=jnp.float32)
    pe = pe.at[:, 0::2].set(jnp.sin(position * div_term))
    pe = pe.at[:, 1::2].set(jnp.cos(position * div_term))
    # unsqueeze(0).transpose(0,1) -> (max_len, 1, d_model)
    return pe[:, None, :]


# ----------------------------------------------------------------------------- kernels
def _pe_add_kernel_aligned(x_ref, pe_ref, o_ref, *, batch: int, d_model: int, compute_dtype):
    # x_ref / o_ref: (tS, B*D) lane-dense tiles; pe_ref: (tS, D) with D % 128 == 0.
    pe = pe_ref[...].astype(compute_dtype)
    if batch <= 16:
        # Static unroll: each slab starts at a 128-lane-aligned offset -> plain
        # vld/vst, no cross-lane (XLU) permutes, no masked stores.
        for b in range(batch):
            sl = slice(b * d_model, (b + 1) * d_model)
            o_ref[:, sl] = (x_ref[:, sl].astype(compute_dtype) + pe).astype(o_ref.dtype)
    else:
        # Large batch: with D % 128 == 0 the tile is whole-vreg lane-block copies.
        pe_wide = jnp.tile(pe, (1, batch))
        o_ref[...] = (x_ref[...].astype(compute_dtype) + pe_wide).astype(o_ref.dtype)


def _pe_add_kernel_plain(x_ref, pe_ref, o_ref, *, compute_dtype):
    # pe already broadcast wrapper-side to the same (tS, B*D) layout as x.
    o_ref[...] = (
        x_ref[...].astype(compute_dtype) + pe_ref[...].astype(compute_dtype)
    ).astype(o_ref.dtype)


# ----------------------------------------------------------------------------- helpers
def _tpu_kind() -> str:
    try:
        return jax.devices()[0].device_kind.lower()
    except Exception:
        return ""


def _default_vmem_limit_bytes(kind: str) -> int:
    if "v7" in kind:
        # 64 MiB physical per TensorCore on v7x -> leave headroom for compiler scratch.
        return 44 * 1024 * 1024
    # v5e / v6e have 128 MiB physical VMEM; only the scoped default (16/32 MiB) is small.
    return 64 * 1024 * 1024


def _pick_tile_s(S: int, BD: int, pe_cols: int, x_itemsize: int, pe_itemsize: int,
                 budget_bytes: int, gran: int, force_two_steps: bool) -> int:
    """Largest sequence-tile (rows) whose double-buffered working set fits the budget."""
    # Only the BlockSpec-managed windows live in VMEM (x-in, out, pe -- 2 buffers each).
    bytes_per_row = 2 * BD * x_itemsize          # x input, double-buffered
    bytes_per_row += 2 * BD * x_itemsize         # output, double-buffered
    bytes_per_row += 2 * pe_cols * pe_itemsize   # pe, double-buffered
    raw = budget_bytes // max(bytes_per_row, 1)

    if raw >= S:
        tile_s = S                               # block == full dim: always legal
    elif raw < gran:
        raise ValueError(
            f"PositionalEncoding: even the minimum tile of {gran} rows "
            f"({gran * bytes_per_row} B double-buffered) does not fit the VMEM budget "
            f"({budget_bytes} B). Reduce batch*d_model or raise vmem_limit_bytes."
        )
    else:
        tile_s = max(gran, (raw // gran) * gran)

    if force_two_steps and S >= 2 * gran:
        # Megacore (v7x): keep at least 2 grid steps so both TensorCores stream HBM.
        cap = max(gran, (pl.cdiv(S, 2) // gran) * gran)
        tile_s = min(tile_s, cap)

    return min(tile_s, S)


# ----------------------------------------------------------------------------- wrapper
def positional_encoding_forward(
    x: jnp.ndarray,
    pe: jnp.ndarray,
    *,
    vmem_limit_bytes: int | None = None,
    vmem_budget_bytes: int | None = None,
    donate_x: bool = False,
) -> jnp.ndarray:
    """x: (S, B, D), pe: (max_len, 1, D).  Returns x + pe[:S] in x's dtype."""
    S, B, D = x.shape
    BD = B * D
    x_itemsize = jnp.dtype(x.dtype).itemsize

    kind = _tpu_kind()
    if vmem_limit_bytes is None:
        vmem_limit_bytes = _default_vmem_limit_bytes(kind)
    if vmem_budget_bytes is None:
        # Tiling budget and compiler limit come from the same number (minus headroom).
        vmem_budget_bytes = max(vmem_limit_bytes - 2 * 1024 * 1024, 1 * 1024 * 1024)

    # Compute / pe-stream dtypes.
    if x.dtype == jnp.bfloat16:
        pe_ship_dtype = jnp.bfloat16                       # halve the pe HBM stream
        native_bf16 = ("v6" in kind) or ("v7" in kind)     # v5e has no bf16 VALU
        compute_dtype = jnp.bfloat16 if native_bf16 else jnp.float32
    else:
        pe_ship_dtype = jnp.float32
        compute_dtype = jnp.float32

    aligned = (D % 128 == 0)
    pe_rows = pe[:S, 0, :]                                 # (S, D) float32 buffer
    if aligned:
        pe_arr = pe_rows.astype(pe_ship_dtype)             # (S, D)
        pe_cols = D
        kernel = partial(_pe_add_kernel_aligned, batch=B, d_model=D,
                         compute_dtype=compute_dtype)
    else:
        # Unaligned d_model: pre-tile over batch wrapper-side so the kernel never does
        # cross-lane (XLU) work; only hit for small / non-128-multiple d_model.
        pe_arr = jnp.tile(pe_rows.astype(pe_ship_dtype), (1, B))   # (S, B*D)
        pe_cols = BD
        kernel = partial(_pe_add_kernel_plain, compute_dtype=compute_dtype)

    gran = max(8, 32 // x_itemsize)                        # full packed sublanes per dtype
    tile_s = _pick_tile_s(
        S, BD, pe_cols, x_itemsize, jnp.dtype(pe_ship_dtype).itemsize,
        vmem_budget_bytes, gran, force_two_steps=("v7" in kind),
    )

    # Free, contiguous reshape to the lane-dense slab.
    x2d = x.reshape(S, BD)
    grid = (pl.cdiv(S, tile_s),)

    # NOTE: if B*D % 128 != 0 the output stores are lane-masked (vst.msk); pad d_model
    # to a multiple of 128 upstream if this path ever becomes hot.
    out2d = pl.pallas_call(
        kernel,
        out_shape=jax.ShapeDtypeStruct((S, BD), x.dtype),
        grid=grid,
        in_specs=[
            pl.BlockSpec((tile_s, BD), lambda i: (i, 0)),
            pl.BlockSpec((tile_s, pe_cols), lambda i: (i, 0)),
        ],
        out_specs=pl.BlockSpec((tile_s, BD), lambda i: (i, 0)),
        compiler_params=pltpu.CompilerParams(
            dimension_semantics=("parallel",),             # megacore-shardable on v7x
            vmem_limit_bytes=vmem_limit_bytes,
        ),
        input_output_aliases=({0: 0} if donate_x else {}),
    )(x2d, pe_arr)

    return out2d.reshape(S, B, D)


# ----------------------------------------------------------------------------- demo
if __name__ == "__main__":
    key = jax.random.PRNGKey(0)
    k1, k2, k3 = jax.random.split(key, 3)

    # --- case 1: module-sized demo (unaligned d_model -> pre-tiled pe path) ---------
    d_model, max_len, seq_len, batch = 32, 64, 8, 2
    pe = _build_pe(d_model, max_len)                       # (max_len, 1, d_model)
    x = jax.random.normal(k1, (seq_len, batch, d_model), dtype=jnp.float32)

    out = jax.block_until_ready(positional_encoding_forward(x, pe))
    ref = x + pe[:seq_len]
    assert out.shape == (seq_len, batch, d_model)
    assert jnp.allclose(out, ref, atol=1e-6), "mismatch vs reference (case 1)"

    # --- case 2: 128-aligned d_model, forced multi-block grid (tiny budget) ---------
    d_model2, seq_len2, batch2 = 128, 32, 4
    pe2 = _build_pe(d_model2, 128)
    x2 = jax.random.normal(k2, (seq_len2, batch2, d_model2), dtype=jnp.float32)

    out2 = jax.block_until_ready(
        positional_encoding_forward(x2, pe2, vmem_budget_bytes=128 * 1024)  # grid > 1
    )
    ref2 = x2 + pe2[:seq_len2]
    assert out2.shape == (seq_len2, batch2, d_model2)
    assert jnp.allclose(out2, ref2, atol=1e-6), "mismatch vs reference (case 2)"

    # --- case 3: bf16 input, aligned d_model (bf16 pe stream / native add path) -----
    d_model3, seq_len3, batch3 = 128, 16, 2
    pe3 = _build_pe(d_model3, 64)
    x3 = jax.random.normal(k3, (seq_len3, batch3, d_model3), dtype=jnp.bfloat16)

    out3 = jax.block_until_ready(positional_encoding_forward(x3, pe3))
    ref3 = (x3.astype(jnp.float32) + pe3[:seq_len3]).astype(jnp.bfloat16)
    assert out3.dtype == jnp.bfloat16
    assert jnp.allclose(out3.astype(jnp.float32), ref3.astype(jnp.float32), atol=0.1), \
        "mismatch vs reference (case 3)"

    print("KERNEL_OK")
</pallas_src>

<mosaic_0001>
module attributes {stable_mosaic.version = 11 : i64} {
  func.func @_pe_add_kernel_plain(%arg0: i32, %arg1: memref<8x64xf32, #tpu.memory_space<vmem>>, %arg2: memref<8x64xf32, #tpu.memory_space<vmem>>, %arg3: memref<8x64xf32, #tpu.memory_space<vmem>>) attributes {dimension_semantics = [#tpu.dimension_semantics<parallel>], iteration_bounds = array<i64: 1>, scalar_prefetch = 0 : i64, scratch_operands = 0 : i64, tpu.core_type = #tpu.core_type<tc>, window_params = [{transform_indices = @transform_0, window_bounds = array<i64: 8, 64>}, {transform_indices = @transform_1, window_bounds = array<i64: 8, 64>}, {transform_indices = @transform_2, window_bounds = array<i64: 8, 64>}]} {
    %c0 = arith.constant 0 : index
    %c0_0 = arith.constant 0 : index
    %0 = vector.load %arg1[%c0, %c0_0] : memref<8x64xf32, #tpu.memory_space<vmem>>, vector<8x64xf32>
    %c0_1 = arith.constant 0 : index
    %c0_2 = arith.constant 0 : index
    %1 = vector.load %arg2[%c0_1, %c0_2] : memref<8x64xf32, #tpu.memory_space<vmem>>, vector<8x64xf32>
    %2 = arith.addf %0, %1 : vector<8x64xf32>
    %c0_3 = arith.constant 0 : index
    %c0_4 = arith.constant 0 : index
    %3 = vector.load %arg3[%c0_3, %c0_4] : memref<8x64xf32, #tpu.memory_space<vmem>>, vector<8x64xf32>
    tpu.vector_store %arg3[%c0_3, %c0_4], %2 {strides = array<i32>} : memref<8x64xf32, #tpu.memory_space<vmem>>, vector<8x64xf32>,
    return
  }
  func.func @transform_0(%arg0: i32) -> (i32, i32) {
    %c0_i32 = arith.constant 0 : i32
    %c0_i32_0 = arith.constant 0 : i32
    return %arg0, %c0_i32 : i32, i32
  }
  func.func @transform_1(%arg0: i32) -> (i32, i32) {
    %c0_i32 = arith.constant 0 : i32
    %c0_i32_0 = arith.constant 0 : i32
    return %arg0, %c0_i32 : i32, i32
  }
  func.func @transform_2(%arg0: i32) -> (i32, i32) {
    %c0_i32 = arith.constant 0 : i32
    %c0_i32_0 = arith.constant 0 : i32
    return %arg0, %c0_i32 : i32, i32
  }
}

</mosaic_0001>

<llo_original>
// kernel: tpu_custom_call.1
$region0: #{tpu_custom_call.1}
  #allocation0 [shape = 'u32[]', space=smem, size = 0x4, offset = 0x4, fixed_abs, tag = 'smem constant byte address 0x4 - core index']
  #allocation1 [shape = 'u32[72,128]{1,0:T(1,128)}', space=vmem, size = 0x9000, scoped, tag = 'internal scratch']
  %s0 = inlined_call_operand.hbm [shape: f32[8,64], index: 0, kind: input, shape index: {}]
  %s1 = inlined_call_operand.hbm [shape: f32[8,64], index: 1, kind: input, shape index: {}]
  %s2 = inlined_call_operand.hbm [shape: f32[8,64], index: 2, kind: output, shape index: {}]
  %s3 = sld [smem:[#allocation0]]
  $region26: #{tpu_custom_call.1} parent=0
    _
  %s5 = ssub.s32 1, %s3
  %s6 = scalar_select 0, %s5, %s3
  $region1: #{tpu_custom_call.1} parent=0
    #allocation2 [shape = 'u8[4096]{0}', space=vmem, size = 0x1000, scoped, tag = 'input window, operand 0, single buffered']
    #allocation3 [shape = 's32[1]{0}', space=sflag, size = 0x4, scoped, tag = 'scoped memory for tpu_custom_call.1']
    #allocation4 [shape = 's32[1]{0}', space=sflag, size = 0x4, scoped, tag = 'scoped memory for tpu_custom_call.1']
    #allocation5 [shape = 'u8[4096]{0}', space=vmem, size = 0x1000, scoped, tag = 'input window, operand 1, single buffered']
    #allocation6 [shape = 's32[1]{0}', space=sflag, size = 0x4, scoped, tag = 'scoped memory for tpu_custom_call.1']
    #allocation7 [shape = 'u8[4096]{0}', space=vmem, size = 0x1000, scoped, tag = 'output window, operand 0, single buffered']
    %7 = vsyncpa [#allocation3], 0
    %8 = vsyncpa [#allocation6], 0
    %9 = vsyncpa [#allocation4], 0
    // Predicated region
    $region2: #{tpu_custom_call.1} parent=1 // pred_check
      _
    $region3: #{tpu_custom_call.1} parent=1 // pred_check_branch
      %11 = sbr.rel (0) target = $region5
    $region4: #{tpu_custom_call.1} parent=1 // pred_region
      %13 = vsyncadd [#allocation3], 0
      %s15 = sshll.u32 %s0, 4
      %s16 = int_to_ptr.hbm [resolvable:$true] %s15
      %s17 = sshll.u32 [#allocation2], 4
      %s18 = int_to_ptr.vmem [resolvable:$true] %s17
      %20 = dma.hbm_to_vmem [thread:$0]  %s16, 128, %s18, [#allocation3]
    $region5: #{tpu_custom_call.1} parent=1 // pred_fallthru
      _
    // Predicated region
    $region6: #{tpu_custom_call.1} parent=1 // pred_check
      _
    $region7: #{tpu_custom_call.1} parent=1 // pred_check_branch
      %22 = sbr.rel (0) target = $region9
    $region8: #{tpu_custom_call.1} parent=1 // pred_region
      %24 = vsyncadd [#allocation6], 0
      %s26 = sshll.u32 %s1, 4
      %s27 = int_to_ptr.hbm [resolvable:$true] %s26
      %s28 = sshll.u32 [#allocation5], 4
      %s29 = int_to_ptr.vmem [resolvable:$true] %s28
      %31 = dma.hbm_to_vmem [thread:$0]  %s27, 128, %s29, [#allocation6]
    $region9: #{tpu_custom_call.1} parent=1 // pred_fallthru
      _
    // Predicated region
    $region10: #{tpu_custom_call.1} parent=1 // pred_check
      _
    $region11: #{tpu_custom_call.1} parent=1 // pred_check_branch
      %33 = sbr.rel (0) target = $region13
    $region12: #{tpu_custom_call.1} parent=1 // pred_region
      %35 = dma.done [#allocation3], 128
    $region13: #{tpu_custom_call.1} parent=1 // pred_fallthru
      _
    // Predicated region
    $region14: #{tpu_custom_call.1} parent=1 // pred_check
      _
    $region15: #{tpu_custom_call.1} parent=1 // pred_check_branch
      %37 = sbr.rel (0) target = $region17
    $region16: #{tpu_custom_call.1} parent=1 // pred_region
      %39 = dma.done [#allocation6], 128
    $region17: #{tpu_custom_call.1} parent=1 // pred_fallthru
      _
    %v40 = vld [vmem:[#allocation2] sm:$0xff]
    %v41 = vld [vmem:[#allocation5] sm:$0xff]
    %v42 = vadd.f32 %v40, %v41
    %vm43 = vcmask 523264
    %44 = vst.msk [vmem:[#allocation7] sm:$0xff] %vm43, %v42
    // Predicated region
    $region18: #{tpu_custom_call.1} parent=1 // pred_check
      _
    $region19: #{tpu_custom_call.1} parent=1 // pred_check_branch
      %46 = sbr.rel (0) target = $region21
    $region20: #{tpu_custom_call.1} parent=1 // pred_region
      %48 = vsyncadd [#allocation4], 0
      %s50 = sshll.u32 [#allocation7], 4
      %s51 = int_to_ptr.vmem [resolvable:$true] %s50
      %s52 = sshll.u32 %s2, 4
      %s53 = int_to_ptr.hbm [resolvable:$true] %s52
      %55 = dma.vmem_to_hbm [thread:$0]  %s51, 128, %s53, [#allocation4]
    $region21: #{tpu_custom_call.1} parent=1 // pred_fallthru
      _
    // Predicated region
    $region22: #{tpu_custom_call.1} parent=1 // pred_check
      _
    $region23: #{tpu_custom_call.1} parent=1 // pred_check_branch
      %57 = sbr.rel (0) target = $region25
    $region24: #{tpu_custom_call.1} parent=1 // pred_region
      %59 = dma.done [#allocation4], 128
    $region25: #{tpu_custom_call.1} parent=1 // pred_fallthru
      _
    %60 = vsyncpa [#allocation3], 1
    %61 = vsyncpa [#allocation6], 1
    %62 = vsyncpa [#allocation4], 1

</llo_original>
